<compile_context>
chip_gen: v5e
topology: v5e:2x2
jax: 0.10.0
libtpu: 0.0.40
codegen_flags: <defaults>
</compile_context>

<pallas_src>
import functools

import jax
import jax.numpy as jnp
from jax.experimental import pallas as pl
from jax.experimental.pallas import tpu as pltpu

# MXU operand dtype (accumulation is always f32). Use jnp.float32 for exact-f32 math.
DOT_DTYPE = jnp.bfloat16


def _upsample_tap_matrices(L, L_up):
    """Tap matrices T of shape (3, L, L_up) with (x @ T[k])[c, t] == up[c, 2*t + k].

    `up` is nn.Upsample(scale_factor=2, mode='linear', align_corners=True) applied
    along the last axis of x (length L -> 2L).  Composing the interpolation with
    the three taps of the following stride-2 conv lets the kernel skip the 2L
    intermediate and any strided slicing entirely (exact, position-dependent weights).
    """
    L2 = 2 * L
    pos = jnp.arange(L2, dtype=jnp.float32) * (L - 1) / (L2 - 1)
    lo = jnp.floor(pos).astype(jnp.int32)
    hi = jnp.minimum(lo + 1, L - 1)
    frac = pos - lo.astype(jnp.float32)
    rows = jnp.arange(L2)
    U = jnp.zeros((L2, L), jnp.float32)            # up[:, j] = sum_l U[j, l] * x[:, l]
    U = U.at[rows, lo].add(1.0 - frac)
    U = U.at[rows, hi].add(frac)
    t = jnp.arange(L_up)
    return jnp.stack([U[2 * t + k].T for k in range(3)], axis=0)   # (3, L, L_up)


def _upsample_fused_kernel(direct_ref, skip_ref, taps_ref, w_up_ref, b_up_ref,
                           w_br_ref, w1_ref, shift1_ref, w2_ref, shift2_ref,
                           o_ref, cat_ref, y1_ref, *,
                           c_half, l_skip, l_up, pad_d_left, neg_slope, dot_dtype):
    f32 = jnp.float32
    x_d = direct_ref[0]                        # (C, L)        dot_dtype
    x_s = skip_ref[0]                          # (C/2, L_skip) dot_dtype

    # ---- up path: Upsample(x2, linear, align_corners) + Conv1d(C->C/2, k3, s2) ----
    # One small interpolation matmul per conv tap (k-major patch rows), then a
    # single im2col dot against the flattened conv weight.
    up_patches = jnp.concatenate(
        [jnp.dot(x_d, taps_ref[k], preferred_element_type=f32) for k in range(3)],
        axis=0)                                                     # (3C, L_up) f32
    d = jnp.dot(w_up_ref[...], up_patches.astype(dot_dtype),
                preferred_element_type=f32) + b_up_ref[...]         # (C/2, L_up)

    # ---- bridge conv: Conv1d(C/2 -> C/2, k=1, 'same', bias=False) on skip ----
    s = jnp.dot(w_br_ref[...], x_s, preferred_element_type=f32)     # (C/2, L_skip)

    # ---- fused F.pad + channel concat: both branches written into a single
    #      zero-initialised VMEM scratch whose halo doubles as stage1's 'same' pad ----
    cat_ref[...] = jnp.zeros_like(cat_ref)
    cat_ref[:c_half, 1:1 + l_skip] = s
    cat_ref[c_half:, 1 + pad_d_left:1 + pad_d_left + l_up] = d

    # ---- DoubleConv stage1: Conv1d(C->3C, k3, 'same') + folded BN + LeakyReLU ----
    p1 = jnp.concatenate([cat_ref[:, k:k + l_skip] for k in range(3)], axis=0)
    y1 = jnp.dot(w1_ref[...], p1.astype(dot_dtype),
                 preferred_element_type=f32) + shift1_ref[...]
    y1 = jnp.where(y1 > 0, y1, neg_slope * y1)

    # ---- stage2 'same' (dilation=2) halo via a second zero-initialised scratch ----
    y1_ref[...] = jnp.zeros_like(y1_ref)
    y1_ref[:, 2:2 + l_skip] = y1

    # ---- DoubleConv stage2: Conv1d(3C->out, k3, dil=2, 'same') + BN + LeakyReLU ----
    p2 = jnp.concatenate([y1_ref[:, 2 * k:2 * k + l_skip] for k in range(3)], axis=0)
    y2 = jnp.dot(w2_ref[...], p2.astype(dot_dtype),
                 preferred_element_type=f32) + shift2_ref[...]
    y2 = jnp.where(y2 > 0, y2, neg_slope * y2)

    o_ref[0] = y2.astype(o_ref.dtype)


def upsample_forward(direct, skip, p, *, dot_dtype=DOT_DTYPE):
    """UpSample.forward(direct_inputs, skip_inputs) as a single fused Pallas kernel."""
    B, C, L = direct.shape
    _, c_skip, L_skip = skip.shape
    C_half = C // 2
    assert c_skip == C_half, (c_skip, C_half)
    out_dtype = direct.dtype
    eps = 1e-5
    neg_slope = 0.01                           # nn.LeakyReLU() default

    # Length after Upsample(x2) + Conv1d(k=3, stride=2, padding=0), then F.pad to L_skip.
    L_up = (2 * L - 3) // 2 + 1
    diff = L_skip - L_up
    assert diff >= 0, (L_skip, L_up)
    pad_d_left = diff // 2

    mid = p["w1"].shape[0]                     # DoubleConv mid_channels (= 3C)
    C_out = p["w2"].shape[0]

    # --- interpolation tap matrices (compose the upsample into the up-conv) ---
    taps = _upsample_tap_matrices(L, L_up).astype(dot_dtype)        # (3, L, L_up)

    # --- weights: k-major im2col flattening; BN scale folded into the weights ---
    w_up = jnp.transpose(p["w_up"], (0, 2, 1)).reshape(C_half, 3 * C).astype(dot_dtype)
    b_up = p["b_up"].reshape(C_half, 1).astype(jnp.float32)
    w_br = p["w_bridge"][:, :, 0].astype(dot_dtype)                 # (C/2, C/2)

    scale1 = p["gamma1"] / jnp.sqrt(p["var1"] + eps)
    shift1 = (p["beta1"] - p["mean1"] * scale1).reshape(mid, 1).astype(jnp.float32)
    w1 = jnp.transpose(p["w1"] * scale1[:, None, None], (0, 2, 1))
    w1 = w1.reshape(mid, 3 * C).astype(dot_dtype)

    scale2 = p["gamma2"] / jnp.sqrt(p["var2"] + eps)
    shift2 = (p["beta2"] - p["mean2"] * scale2).reshape(C_out, 1).astype(jnp.float32)
    w2 = jnp.transpose(p["w2"] * scale2[:, None, None], (0, 2, 1))
    w2 = w2.reshape(C_out, 3 * mid).astype(dot_dtype)

    kernel = functools.partial(
        _upsample_fused_kernel,
        c_half=C_half, l_skip=L_skip, l_up=L_up,
        pad_d_left=pad_d_left, neg_slope=neg_slope, dot_dtype=dot_dtype)

    return pl.pallas_call(
        kernel,
        out_shape=jax.ShapeDtypeStruct((B, C_out, L_skip), out_dtype),
        grid=(B,),
        in_specs=[
            pl.BlockSpec((1, C, L), lambda b: (b, 0, 0)),             # direct
            pl.BlockSpec((1, C_half, L_skip), lambda b: (b, 0, 0)),   # skip
            pl.BlockSpec((3, L, L_up), lambda b: (0, 0, 0)),          # interp taps
            pl.BlockSpec((C_half, 3 * C), lambda b: (0, 0)),          # w_up (im2col)
            pl.BlockSpec((C_half, 1), lambda b: (0, 0)),              # b_up
            pl.BlockSpec((C_half, C_half), lambda b: (0, 0)),         # w_bridge
            pl.BlockSpec((mid, 3 * C), lambda b: (0, 0)),             # w1 (BN-scaled)
            pl.BlockSpec((mid, 1), lambda b: (0, 0)),                 # shift1
            pl.BlockSpec((C_out, 3 * mid), lambda b: (0, 0)),         # w2 (BN-scaled)
            pl.BlockSpec((C_out, 1), lambda b: (0, 0)),               # shift2
        ],
        out_specs=pl.BlockSpec((1, C_out, L_skip), lambda b: (b, 0, 0)),
        scratch_shapes=[
            pltpu.VMEM((C, L_skip + 2), jnp.float32),       # padded [skip ; direct]
            pltpu.VMEM((mid, L_skip + 4), jnp.float32),     # padded stage1 output
        ],
        compiler_params=pltpu.CompilerParams(
            dimension_semantics=("parallel",)),             # v7x: 2 TCs split batch
    )(direct.astype(dot_dtype), skip.astype(dot_dtype), taps,
      w_up, b_up, w_br, w1, shift1, w2, shift2)


# --------------------------------------------------------------------------
if __name__ == "__main__":
    key = jax.random.PRNGKey(0)
    B, C, L = 2, 8, 16          # in_channels=8
    out_channels = 4
    C_half = C // 2
    mid = C * 3                 # DoubleConv mid_channels = in_channels * 3

    ks = jax.random.split(key, 16)
    direct_inputs = jax.random.normal(ks[0], (B, C, L), jnp.float32)
    skip_inputs = jax.random.normal(ks[1], (B, C_half, L), jnp.float32)

    params = {
        # up conv: Conv1d(C, C//2, k=3, stride=2, bias=True)
        "w_up": 0.1 * jax.random.normal(ks[2], (C_half, C, 3), jnp.float32),
        "b_up": 0.1 * jax.random.normal(ks[3], (C_half,), jnp.float32),
        # bridge conv: Conv1d(C//2, C//2, k=1, bias=False)
        "w_bridge": 0.1 * jax.random.normal(ks[4], (C_half, C_half, 1), jnp.float32),
        # DoubleConv stage1
        "w1": 0.1 * jax.random.normal(ks[5], (mid, C, 3), jnp.float32),
        "gamma1": 1.0 + 0.1 * jax.random.normal(ks[6], (mid,), jnp.float32),
        "beta1": 0.1 * jax.random.normal(ks[7], (mid,), jnp.float32),
        "mean1": 0.1 * jax.random.normal(ks[8], (mid,), jnp.float32),
        "var1": 0.5 + jnp.abs(jax.random.normal(ks[9], (mid,), jnp.float32)),
        # DoubleConv stage2
        "w2": 0.1 * jax.random.normal(ks[10], (out_channels, mid, 3), jnp.float32),
        "gamma2": 1.0 + 0.1 * jax.random.normal(ks[11], (out_channels,), jnp.float32),
        "beta2": 0.1 * jax.random.normal(ks[12], (out_channels,), jnp.float32),
        "mean2": 0.1 * jax.random.normal(ks[13], (out_channels,), jnp.float32),
        "var2": 0.5 + jnp.abs(jax.random.normal(ks[14], (out_channels,), jnp.float32)),
    }

    out = upsample_forward(direct_inputs, skip_inputs, params)
    out = jax.block_until_ready(out)
    assert out.shape == (B, out_channels, L), out.shape
    assert bool(jnp.all(jnp.isfinite(out)))
    print("KERNEL_OK")
</pallas_src>

<mosaic_0001>
module attributes {stable_mosaic.version = 11 : i64} {
  func.func @_upsample_fused_kernel(%arg0: i32, %arg1: memref<1x8x16xbf16, #tpu.memory_space<vmem>>, %arg2: memref<1x4x16xbf16, #tpu.memory_space<vmem>>, %arg3: memref<3x16x15xbf16, #tpu.memory_space<vmem>>, %arg4: memref<4x24xbf16, #tpu.memory_space<vmem>>, %arg5: memref<4x1xf32, #tpu.memory_space<vmem>>, %arg6: memref<4x4xbf16, #tpu.memory_space<vmem>>, %arg7: memref<24x24xbf16, #tpu.memory_space<vmem>>, %arg8: memref<24x1xf32, #tpu.memory_space<vmem>>, %arg9: memref<4x72xbf16, #tpu.memory_space<vmem>>, %arg10: memref<4x1xf32, #tpu.memory_space<vmem>>, %arg11: memref<1x4x16xf32, #tpu.memory_space<vmem>>, %arg12: memref<8x18xf32, #tpu.memory_space<vmem>>, %arg13: memref<24x20xf32, #tpu.memory_space<vmem>>) attributes {dimension_semantics = [#tpu.dimension_semantics<parallel>], iteration_bounds = array<i64: 2>, scalar_prefetch = 0 : i64, scratch_operands = 2 : i64, tpu.core_type = #tpu.core_type<tc>, window_params = [{transform_indices = @transform_0, window_bounds = array<i64: 1, 8, 16>}, {transform_indices = @transform_1, window_bounds = array<i64: 1, 4, 16>}, {pipeline_mode = #tpu.pipeline_mode<synchronous>, transform_indices = @transform_2, window_bounds = array<i64: 3, 16, 15>}, {pipeline_mode = #tpu.pipeline_mode<synchronous>, transform_indices = @transform_3, window_bounds = array<i64: 4, 24>}, {pipeline_mode = #tpu.pipeline_mode<synchronous>, transform_indices = @transform_4, window_bounds = array<i64: 4, 1>}, {pipeline_mode = #tpu.pipeline_mode<synchronous>, transform_indices = @transform_5, window_bounds = array<i64: 4, 4>}, {pipeline_mode = #tpu.pipeline_mode<synchronous>, transform_indices = @transform_6, window_bounds = array<i64: 24, 24>}, {pipeline_mode = #tpu.pipeline_mode<synchronous>, transform_indices = @transform_7, window_bounds = array<i64: 24, 1>}, {pipeline_mode = #tpu.pipeline_mode<synchronous>, transform_indices = @transform_8, window_bounds = array<i64: 4, 72>}, {pipeline_mode = #tpu.pipeline_mode<synchronous>, transform_indices = @transform_9, window_bounds = array<i64: 4, 1>}, {transform_indices = @transform_10, window_bounds = array<i64: 1, 4, 16>}]} {
    %c0 = arith.constant 0 : index
    %c0_0 = arith.constant 0 : index
    %c0_1 = arith.constant 0 : index
    %0 = vector.load %arg1[%c0, %c0_0, %c0_1] : memref<1x8x16xbf16, #tpu.memory_space<vmem>>, vector<1x8x16xbf16>
    %1 = vector.shape_cast %0 : vector<1x8x16xbf16> to vector<8x16xbf16>
    %c0_2 = arith.constant 0 : index
    %c0_3 = arith.constant 0 : index
    %c0_4 = arith.constant 0 : index
    %2 = vector.load %arg2[%c0_2, %c0_3, %c0_4] : memref<1x4x16xbf16, #tpu.memory_space<vmem>>, vector<1x4x16xbf16>
    %3 = vector.shape_cast %2 : vector<1x4x16xbf16> to vector<4x16xbf16>
    %c0_5 = arith.constant 0 : index
    %c0_6 = arith.constant 0 : index
    %c0_7 = arith.constant 0 : index
    %4 = vector.load %arg3[%c0_5, %c0_6, %c0_7] : memref<3x16x15xbf16, #tpu.memory_space<vmem>>, vector<1x16x15xbf16>
    %5 = vector.shape_cast %4 : vector<1x16x15xbf16> to vector<16x15xbf16>
    %cst = arith.constant dense<0.000000e+00> : vector<8x15xf32>
    %6 = tpu.matmul %1, %5, %cst {dimension_numbers = #tpu.dot_dimension_numbers<[1], [0], [0], [1], [0, 0, 1, 1], [], []>} : vector<8x16xbf16>, vector<16x15xbf16>, vector<8x15xf32> -> vector<8x15xf32>
    %c1 = arith.constant 1 : index
    %c0_8 = arith.constant 0 : index
    %c0_9 = arith.constant 0 : index
    %7 = vector.load %arg3[%c1, %c0_8, %c0_9] : memref<3x16x15xbf16, #tpu.memory_space<vmem>>, vector<1x16x15xbf16>
    %8 = vector.shape_cast %7 : vector<1x16x15xbf16> to vector<16x15xbf16>
    %cst_10 = arith.constant dense<0.000000e+00> : vector<8x15xf32>
    %9 = tpu.matmul %1, %8, %cst_10 {dimension_numbers = #tpu.dot_dimension_numbers<[1], [0], [0], [1], [0, 0, 1, 1], [], []>} : vector<8x16xbf16>, vector<16x15xbf16>, vector<8x15xf32> -> vector<8x15xf32>
    %c2 = arith.constant 2 : index
    %c0_11 = arith.constant 0 : index
    %c0_12 = arith.constant 0 : index
    %10 = vector.load %arg3[%c2, %c0_11, %c0_12] : memref<3x16x15xbf16, #tpu.memory_space<vmem>>, vector<1x16x15xbf16>
    %11 = vector.shape_cast %10 : vector<1x16x15xbf16> to vector<16x15xbf16>
    %cst_13 = arith.constant dense<0.000000e+00> : vector<8x15xf32>
    %12 = tpu.matmul %1, %11, %cst_13 {dimension_numbers = #tpu.dot_dimension_numbers<[1], [0], [0], [1], [0, 0, 1, 1], [], []>} : vector<8x16xbf16>, vector<16x15xbf16>, vector<8x15xf32> -> vector<8x15xf32>
    %13 = tpu.concatenate %6, %9, %12 in 0 : vector<8x15xf32>, vector<8x15xf32>, vector<8x15xf32> -> vector<24x15xf32>
    %c0_14 = arith.constant 0 : index
    %c0_15 = arith.constant 0 : index
    %14 = vector.load %arg4[%c0_14, %c0_15] : memref<4x24xbf16, #tpu.memory_space<vmem>>, vector<4x24xbf16>
    %15 = arith.truncf %13 : vector<24x15xf32> to vector<24x15xbf16>
    %cst_16 = arith.constant dense<0.000000e+00> : vector<4x15xf32>
    %16 = tpu.matmul %14, %15, %cst_16 {dimension_numbers = #tpu.dot_dimension_numbers<[1], [0], [0], [1], [0, 0, 1, 1], [], []>} : vector<4x24xbf16>, vector<24x15xbf16>, vector<4x15xf32> -> vector<4x15xf32>
    %c0_17 = arith.constant 0 : index
    %c0_18 = arith.constant 0 : index
    %17 = vector.load %arg5[%c0_17, %c0_18] : memref<4x1xf32, #tpu.memory_space<vmem>>, vector<4x1xf32>
    %18 = vector.broadcast %17 : vector<4x1xf32> to vector<4x15xf32>
    %19 = arith.addf %16, %18 : vector<4x15xf32>
    %c0_19 = arith.constant 0 : index
    %c0_20 = arith.constant 0 : index
    %20 = vector.load %arg6[%c0_19, %c0_20] : memref<4x4xbf16, #tpu.memory_space<vmem>>, vector<4x4xbf16>
    %cst_21 = arith.constant dense<0.000000e+00> : vector<4x16xf32>
    %21 = tpu.matmul %20, %3, %cst_21 {dimension_numbers = #tpu.dot_dimension_numbers<[1], [0], [0], [1], [0, 0, 1, 1], [], []>} : vector<4x4xbf16>, vector<4x16xbf16>, vector<4x16xf32> -> vector<4x16xf32>
    %cst_22 = arith.constant 0.000000e+00 : f32
    %22 = vector.broadcast %cst_22 : f32 to vector<8x18xf32>
    %c0_23 = arith.constant 0 : index
    %c0_24 = arith.constant 0 : index
    %23 = vector.load %arg12[%c0_23, %c0_24] : memref<8x18xf32, #tpu.memory_space<vmem>>, vector<8x18xf32>
    tpu.vector_store %arg12[%c0_23, %c0_24], %22 {strides = array<i32>} : memref<8x18xf32, #tpu.memory_space<vmem>>, vector<8x18xf32>,
    %c0_25 = arith.constant 0 : index
    %c1_26 = arith.constant 1 : index
    %24 = vector.load %arg12[%c0_25, %c1_26] : memref<8x18xf32, #tpu.memory_space<vmem>>, vector<4x16xf32>
    tpu.vector_store %arg12[%c0_25, %c1_26], %21 {strides = array<i32>} : memref<8x18xf32, #tpu.memory_space<vmem>>, vector<4x16xf32>,
    %c4 = arith.constant 4 : index
    %c1_27 = arith.constant 1 : index
    %25 = vector.load %arg12[%c4, %c1_27] : memref<8x18xf32, #tpu.memory_space<vmem>>, vector<4x15xf32>
    tpu.vector_store %arg12[%c4, %c1_27], %19 {strides = array<i32>} : memref<8x18xf32, #tpu.memory_space<vmem>>, vector<4x15xf32>,
    %c0_28 = arith.constant 0 : index
    %c0_29 = arith.constant 0 : index
    %26 = vector.load %arg12[%c0_28, %c0_29] : memref<8x18xf32, #tpu.memory_space<vmem>>, vector<8x16xf32>
    %c0_30 = arith.constant 0 : index
    %c1_31 = arith.constant 1 : index
    %27 = vector.load %arg12[%c0_30, %c1_31] : memref<8x18xf32, #tpu.memory_space<vmem>>, vector<8x16xf32>
    %c0_32 = arith.constant 0 : index
    %c2_33 = arith.constant 2 : index
    %28 = vector.load %arg12[%c0_32, %c2_33] : memref<8x18xf32, #tpu.memory_space<vmem>>, vector<8x16xf32>
    %29 = tpu.concatenate %26, %27, %28 in 0 : vector<8x16xf32>, vector<8x16xf32>, vector<8x16xf32> -> vector<24x16xf32>
    %c0_34 = arith.constant 0 : index
    %c0_35 = arith.constant 0 : index
    %30 = vector.load %arg7[%c0_34, %c0_35] : memref<24x24xbf16, #tpu.memory_space<vmem>>, vector<24x24xbf16>
    %31 = arith.truncf %29 : vector<24x16xf32> to vector<24x16xbf16>
    %cst_36 = arith.constant dense<0.000000e+00> : vector<24x16xf32>
    %32 = tpu.matmul %30, %31, %cst_36 {dimension_numbers = #tpu.dot_dimension_numbers<[1], [0], [0], [1], [0, 0, 1, 1], [], []>} : vector<24x24xbf16>, vector<24x16xbf16>, vector<24x16xf32> -> vector<24x16xf32>
    %c0_37 = arith.constant 0 : index
    %c0_38 = arith.constant 0 : index
    %33 = vector.load %arg8[%c0_37, %c0_38] : memref<24x1xf32, #tpu.memory_space<vmem>>, vector<24x1xf32>
    %34 = vector.broadcast %33 : vector<24x1xf32> to vector<24x16xf32>
    %35 = arith.addf %32, %34 : vector<24x16xf32>
    %cst_39 = arith.constant 0.000000e+00 : f32
    %36 = vector.broadcast %cst_39 : f32 to vector<24x16xf32>
    %37 = arith.cmpf ogt, %35, %36 : vector<24x16xf32>
    %cst_40 = arith.constant 0.00999999977 : f32
    %38 = vector.broadcast %cst_40 : f32 to vector<24x16xf32>
    %39 = arith.mulf %38, %35 : vector<24x16xf32>
    %40 = arith.select %37, %35, %39 : vector<24x16xi1>, vector<24x16xf32>
    %cst_41 = arith.constant 0.000000e+00 : f32
    %41 = vector.broadcast %cst_41 : f32 to vector<24x20xf32>
    %c0_42 = arith.constant 0 : index
    %c0_43 = arith.constant 0 : index
    %42 = vector.load %arg13[%c0_42, %c0_43] : memref<24x20xf32, #tpu.memory_space<vmem>>, vector<24x20xf32>
    tpu.vector_store %arg13[%c0_42, %c0_43], %41 {strides = array<i32>} : memref<24x20xf32, #tpu.memory_space<vmem>>, vector<24x20xf32>,
    %c0_44 = arith.constant 0 : index
    %c2_45 = arith.constant 2 : index
    %43 = vector.load %arg13[%c0_44, %c2_45] : memref<24x20xf32, #tpu.memory_space<vmem>>, vector<24x16xf32>
    tpu.vector_store %arg13[%c0_44, %c2_45], %40 {strides = array<i32>} : memref<24x20xf32, #tpu.memory_space<vmem>>, vector<24x16xf32>,
    %c0_46 = arith.constant 0 : index
    %c0_47 = arith.constant 0 : index
    %44 = vector.load %arg13[%c0_46, %c0_47] : memref<24x20xf32, #tpu.memory_space<vmem>>, vector<24x16xf32>
    %c0_48 = arith.constant 0 : index
    %c2_49 = arith.constant 2 : index
    %45 = vector.load %arg13[%c0_48, %c2_49] : memref<24x20xf32, #tpu.memory_space<vmem>>, vector<24x16xf32>
    %c0_50 = arith.constant 0 : index
    %c4_51 = arith.constant 4 : index
    %46 = vector.load %arg13[%c0_50, %c4_51] : memref<24x20xf32, #tpu.memory_space<vmem>>, vector<24x16xf32>
    %47 = tpu.concatenate %44, %45, %46 in 0 : vector<24x16xf32>, vector<24x16xf32>, vector<24x16xf32> -> vector<72x16xf32>
    %c0_52 = arith.constant 0 : index
    %c0_53 = arith.constant 0 : index
    %48 = vector.load %arg9[%c0_52, %c0_53] : memref<4x72xbf16, #tpu.memory_space<vmem>>, vector<4x72xbf16>
    %49 = arith.truncf %47 : vector<72x16xf32> to vector<72x16xbf16>
    %cst_54 = arith.constant dense<0.000000e+00> : vector<4x16xf32>
    %50 = tpu.matmul %48, %49, %cst_54 {dimension_numbers = #tpu.dot_dimension_numbers<[1], [0], [0], [1], [0, 0, 1, 1], [], []>} : vector<4x72xbf16>, vector<72x16xbf16>, vector<4x16xf32> -> vector<4x16xf32>
    %c0_55 = arith.constant 0 : index
    %c0_56 = arith.constant 0 : index
    %51 = vector.load %arg10[%c0_55, %c0_56] : memref<4x1xf32, #tpu.memory_space<vmem>>, vector<4x1xf32>
    %52 = vector.broadcast %51 : vector<4x1xf32> to vector<4x16xf32>
    %53 = arith.addf %50, %52 : vector<4x16xf32>
    %cst_57 = arith.constant 0.000000e+00 : f32
    %54 = vector.broadcast %cst_57 : f32 to vector<4x16xf32>
    %55 = arith.cmpf ogt, %53, %54 : vector<4x16xf32>
    %cst_58 = arith.constant 0.00999999977 : f32
    %56 = vector.broadcast %cst_58 : f32 to vector<4x16xf32>
    %57 = arith.mulf %56, %53 : vector<4x16xf32>
    %58 = arith.select %55, %53, %57 : vector<4x16xi1>, vector<4x16xf32>
    %c0_59 = arith.constant 0 : index
    %c0_60 = arith.constant 0 : index
    %c0_61 = arith.constant 0 : index
    %59 = vector.load %arg11[%c0_59, %c0_60, %c0_61] : memref<1x4x16xf32, #tpu.memory_space<vmem>>, vector<1x4x16xf32>
    %60 = vector.shape_cast %59 : vector<1x4x16xf32> to vector<4x16xf32>
    %61 = vector.shape_cast %58 : vector<4x16xf32> to vector<1x4x16xf32>
    tpu.vector_store %arg11[%c0_59, %c0_60, %c0_61], %61 {strides = array<i32>} : memref<1x4x16xf32, #tpu.memory_space<vmem>>, vector<1x4x16xf32>,
    return
  }
  func.func @transform_0(%arg0: i32) -> (i32, i32, i32) {
    %c0_i32 = arith.constant 0 : i32
    %c0_i32_0 = arith.constant 0 : i32
    %c0_i32_1 = arith.constant 0 : i32
    return %arg0, %c0_i32, %c0_i32_0 : i32, i32, i32
  }
  func.func @transform_1(%arg0: i32) -> (i32, i32, i32) {
    %c0_i32 = arith.constant 0 : i32
    %c0_i32_0 = arith.constant 0 : i32
    %c0_i32_1 = arith.constant 0 : i32
    return %arg0, %c0_i32, %c0_i32_0 : i32, i32, i32
  }
  func.func @transform_2(%arg0: i32) -> (i32, i32, i32) {
    %c0_i32 = arith.constant 0 : i32
    %c0_i32_0 = arith.constant 0 : i32
    %c0_i32_1 = arith.constant 0 : i32
    %c0_i32_2 = arith.constant 0 : i32
    return %c0_i32, %c0_i32_0, %c0_i32_1 : i32, i32, i32
  }
  func.func @transform_3(%arg0: i32) -> (i32, i32) {
    %c0_i32 = arith.constant 0 : i32
    %c0_i32_0 = arith.constant 0 : i32
    %c0_i32_1 = arith.constant 0 : i32
    return %c0_i32, %c0_i32_0 : i32, i32
  }
  func.func @transform_4(%arg0: i32) -> (i32, i32) {
    %c0_i32 = arith.constant 0 : i32
    %c0_i32_0 = arith.constant 0 : i32
    %c0_i32_1 = arith.constant 0 : i32
    return %c0_i32, %c0_i32_0 : i32, i32
  }
  func.func @transform_5(%arg0: i32) -> (i32, i32) {
    %c0_i32 = arith.constant 0 : i32
    %c0_i32_0 = arith.constant 0 : i32
    %c0_i32_1 = arith.constant 0 : i32
    return %c0_i32, %c0_i32_0 : i32, i32
  }
  func.func @transform_6(%arg0: i32) -> (i32, i32) {
    %c0_i32 = arith.constant 0 : i32
    %c0_i32_0 = arith.constant 0 : i32
    %c0_i32_1 = arith.constant 0 : i32
    return %c0_i32, %c0_i32_0 : i32, i32
  }
  func.func @transform_7(%arg0: i32) -> (i32, i32) {
    %c0_i32 = arith.constant 0 : i32
    %c0_i32_0 = arith.constant 0 : i32
    %c0_i32_1 = arith.constant 0 : i32
    return %c0_i32, %c0_i32_0 : i32, i32
  }
  func.func @transform_8(%arg0: i32) -> (i32, i32) {
    %c0_i32 = arith.constant 0 : i32
    %c0_i32_0 = arith.constant 0 : i32
    %c0_i32_1 = arith.constant 0 : i32
    return %c0_i32, %c0_i32_0 : i32, i32
  }
  func.func @transform_9(%arg0: i32) -> (i32, i32) {
    %c0_i32 = arith.constant 0 : i32
    %c0_i32_0 = arith.constant 0 : i32
    %c0_i32_1 = arith.constant 0 : i32
    return %c0_i32, %c0_i32_0 : i32, i32
  }
  func.func @transform_10(%arg0: i32) -> (i32, i32, i32) {
    %c0_i32 = arith.constant 0 : i32
    %c0_i32_0 = arith.constant 0 : i32
    %c0_i32_1 = arith.constant 0 : i32
    return %arg0, %c0_i32, %c0_i32_0 : i32, i32, i32
  }
}

</mosaic_0001>

<llo_original>
// kernel: tpu_custom_call.1
$region0: #{tpu_custom_call.1}
  #allocation0 [shape = 'u32[]', space=smem, size = 0x4, offset = 0x4, fixed_abs, tag = 'smem constant byte address 0x4 - core index']
  #allocation1 [shape = 'u32[72,128]{1,0:T(1,128)}', space=vmem, size = 0x9000, scoped, tag = 'internal scratch']
  #allocation2 [shape = 'f32[8,18]{1,0:T(8,128)}', space=vmem, size = 0x1000, scoped, tag = 'scratch operand']
  #allocation3 [shape = 'f32[24,20]{1,0:T(8,128)}', space=vmem, size = 0x3000, scoped, tag = 'scratch operand']
  %s0 = inlined_call_operand.hbm [shape: bf16[2,8,16], index: 0, kind: input, shape index: {}]
  %s1 = inlined_call_operand.vmem [shape: bf16[2,4,16], index: 1, kind: input, shape index: {}]
  %s2 = inlined_call_operand.vmem [shape: bf16[3,16,15], index: 2, kind: input, shape index: {}]
  %s3 = inlined_call_operand.vmem [shape: bf16[4,24], index: 3, kind: input, shape index: {}]
  %s4 = inlined_call_operand.vmem [shape: f32[4,1], index: 4, kind: input, shape index: {}]
  %s5 = inlined_call_operand.vmem [shape: bf16[4,4], index: 5, kind: input, shape index: {}]
  %s6 = inlined_call_operand.hbm [shape: bf16[24,24], index: 6, kind: input, shape index: {}]
  %s7 = inlined_call_operand.vmem [shape: f32[24,1], index: 7, kind: input, shape index: {}]
  %s8 = inlined_call_operand.vmem [shape: bf16[4,72], index: 8, kind: input, shape index: {}]
  %s9 = inlined_call_operand.vmem [shape: f32[4,1], index: 9, kind: input, shape index: {}]
  %s10 = inlined_call_operand.hbm [shape: f32[2,4,16], index: 10, kind: output, shape index: {}]
  %s11 = sld [smem:[#allocation0]]
  $region81: #{tpu_custom_call.1} parent=0
    _
  %s13 = ssub.s32 1, %s11
  %s14 = scalar_select 0, %s13, %s11
  $region1: #{tpu_custom_call.1} parent=0
    #allocation4 [shape = 'u8[4096]{0}', space=vmem, size = 0x1000, scoped, tag = 'input window, operand 0']
    #allocation5 [shape = 's32[2]{0}', space=sflag, size = 0x8, scoped, tag = 'scoped memory for tpu_custom_call.1']
    #allocation6 [shape = 's32[2]{0}', space=sflag, size = 0x8, scoped, tag = 'scoped memory for tpu_custom_call.1']
    #allocation7 [shape = 'u8[6144]{0}', space=vmem, size = 0x1800, scoped, tag = 'input window, operand 6, single buffered']
    #allocation8 [shape = 's32[1]{0}', space=sflag, size = 0x4, scoped, tag = 'scoped memory for tpu_custom_call.1']
    #allocation9 [shape = 'u8[4096]{0}', space=vmem, size = 0x1000, scoped, tag = 'output window, operand 0']
    %15 = vsyncpa [#allocation5], 0
    %s16 = scalar_lea.sflag [#allocation5], 1
    %17 = vsyncpa %s16, 0
    %18 = vsyncpa [#allocation8], 0
    %19 = vsyncpa [#allocation6], 0
    %s20 = scalar_lea.sflag [#allocation6], 1
    %21 = vsyncpa %s20, 0
    loop: start=0, step=1, limit=4
    $region2: #{tpu_custom_call.1} parent=1 // loop_pre_header
      _
    $region3: #{tpu_custom_call.1} parent=1 // loop_header
      %s23 = sphi 0, %s27
      %p24 = scmp.ge.s32.totalorder %s23, 4
      %s33 = sphi 0, %s35
      %s36 = sphi 0, %s33
      %s37 = sphi 0, %s36
      %s53 = sphi 0, %s37
      %s59 = sphi 0, %s61
      %s62 = sphi 0, %s59
      %s63 = sphi 0, %s62
      %s79 = sphi 0, %s63
      %s83 = sphi 0, %s83
      %s85 = sphi 0, %s83
      %s86 = sphi 0, %s85
      %s100 = sphi 0, %s86
      %s104 = sphi 0, %s104
      %s106 = sphi 0, %s104
      %s107 = sphi 0, %s106
      %s121 = sphi 0, %s107
      %s125 = sphi 0, %s125
      %s127 = sphi 0, %s125
      %s128 = sphi 0, %s127
      %s142 = sphi 0, %s128
      %s146 = sphi 0, %s146
      %s148 = sphi 0, %s146
      %s149 = sphi 0, %s148
      %s163 = sphi 0, %s149
      %s167 = sphi 0, %s167
      %s169 = sphi 0, %s167
      %s170 = sphi 0, %s169
      %s184 = sphi 0, %s170
      %s188 = sphi 0, %s188
      %s190 = sphi 0, %s188
      %s191 = sphi 0, %s190
      %s205 = sphi 0, %s191
      %s209 = sphi 0, %s209
      %s211 = sphi 0, %s209
      %s212 = sphi 0, %s211
      %s226 = sphi 0, %s212
      %s230 = sphi 0, %s230
      %s232 = sphi 0, %s230
      %s233 = sphi 0, %s232
      %s247 = sphi 0, %s233
      %s253 = sphi 0, %s255
      %s256 = sphi 0, %s253
      %s257 = sphi 0, %s256
      %s273 = sphi 0, %s257
    $region4: #{tpu_custom_call.1} parent=1 // loop_header_branch
      %26 = sbr.rel (%p24) target = $region8
    $region5: #{tpu_custom_call.1} parent=1 // loop_body
      %s28 = ssub.s32 %s23, 1
      %s29 = ssub.s32 %s23, 2
      %s30 = sadd.s32 %s23, 1
      %s31 = ssub.s32 %s23, %s30
      %p32 = scmp.eq.s32.totalorder %s31, 0
      %s34 = sadd.s32 %s33, 1
      %s35 = scalar_select %p32, %s33, %s34
      %p38 = pneg %p32
      %p39 = scmp.eq.s32.totalorder %s23, 1
      %p40 = por %p38, %p39
      %p41 = scmp.ne.s32.totalorder %s33, %s36
      %p42 = scmp.eq.s32.totalorder %s23, 0
      %p43 = por %p41, %p42
      %p44 = scmp.ne.s32.totalorder %s33, %s36
      %p45 = scmp.eq.s32.totalorder %s28, 1
      %p46 = por %p44, %p45
      %p47 = scmp.ne.s32.totalorder %s36, %s37
      %p48 = scmp.eq.s32.totalorder %s28, 0
      %p49 = por %p47, %p48
      %p50 = scmp.ne.s32.totalorder %s36, %s37
      %p51 = scmp.eq.s32.totalorder %s29, 1
      %p52 = por %p50, %p51
      %p54 = scmp.ne.s32.totalorder %s37, %s53
      %p55 = scmp.eq.s32.totalorder %s29, 0
      %p56 = por %p54, %p55
      %s57 = ssub.s32 %s23, %s30
      %p58 = scmp.eq.s32.totalorder %s57, 0
      %s60 = sadd.s32 %s59, 1
      %s61 = scalar_select %p58, %s59, %s60
      %p64 = pneg %p58
      %p65 = scmp.eq.s32.totalorder %s23, 1
      %p66 = por %p64, %p65
      %p67 = scmp.ne.s32.totalorder %s59, %s62
      %p68 = scmp.eq.s32.totalorder %s23, 0
      %p69 = por %p67, %p68
      %p70 = scmp.ne.s32.totalorder %s59, %s62
      %p71 = scmp.eq.s32.totalorder %s28, 1
      %p72 = por %p70, %p71
      %p73 = scmp.ne.s32.totalorder %s62, %s63
      %p74 = scmp.eq.s32.totalorder %s28, 0
      %p75 = por %p73, %p74
      %p76 = scmp.ne.s32.totalorder %s62, %s63
      %p77 = scmp.eq.s32.totalorder %s29, 1
      %p78 = por %p76, %p77
      %p80 = scmp.ne.s32.totalorder %s63, %s79
      %p81 = scmp.eq.s32.totalorder %s29, 0
      %p82 = por %p80, %p81
      %s84 = sadd.s32 %s83, 1
      %p87 = scmp.eq.s32.totalorder %s23, 1
      %p88 = scmp.ne.s32.totalorder %s83, %s85
      %p89 = scmp.eq.s32.totalorder %s23, 0
      %p90 = por %p88, %p89
      %p91 = scmp.ne.s32.totalorder %s83, %s85
      %p92 = scmp.eq.s32.totalorder %s28, 1
      %p93 = por %p91, %p92
      %p94 = scmp.ne.s32.totalorder %s85, %s86
      %p95 = scmp.eq.s32.totalorder %s28, 0
      %p96 = por %p94, %p95
      %p97 = scmp.ne.s32.totalorder %s85, %s86
      %p98 = scmp.eq.s32.totalorder %s29, 1
      %p99 = por %p97, %p98
      %p101 = scmp.ne.s32.totalorder %s86, %s100
      %p102 = scmp.eq.s32.totalorder %s29, 0
      %p103 = por %p101, %p102
      %s105 = sadd.s32 %s104, 1
      %p108 = scmp.eq.s32.totalorder %s23, 1
      %p109 = scmp.ne.s32.totalorder %s104, %s106
      %p110 = scmp.eq.s32.totalorder %s23, 0
      %p111 = por %p109, %p110
      %p112 = scmp.ne.s32.totalorder %s104, %s106
      %p113 = scmp.eq.s32.totalorder %s28, 1
      %p114 = por %p112, %p113
      %p115 = scmp.ne.s32.totalorder %s106, %s107
      %p116 = scmp.eq.s32.totalorder %s28, 0
      %p117 = por %p115, %p116
      %p118 = scmp.ne.s32.totalorder %s106, %s107
      %p119 = scmp.eq.s32.totalorder %s29, 1
      %p120 = por %p118, %p119
      %p122 = scmp.ne.s32.totalorder %s107, %s121
      %p123 = scmp.eq.s32.totalorder %s29, 0
      %p124 = por %p122, %p123
      %s126 = sadd.s32 %s125, 1
      %p129 = scmp.eq.s32.totalorder %s23, 1
      %p130 = scmp.ne.s32.totalorder %s125, %s127
      %p131 = scmp.eq.s32.totalorder %s23, 0
      %p132 = por %p130, %p131
      %p133 = scmp.ne.s32.totalorder %s125, %s127
      %p134 = scmp.eq.s32.totalorder %s28, 1
      %p135 = por %p133, %p134
      %p136 = scmp.ne.s32.totalorder %s127, %s128
      %p137 = scmp.eq.s32.totalorder %s28, 0
      %p138 = por %p136, %p137
      %p139 = scmp.ne.s32.totalorder %s127, %s128
      %p140 = scmp.eq.s32.totalorder %s29, 1
      %p141 = por %p139, %p140
      %p143 = scmp.ne.s32.totalorder %s128, %s142
      %p144 = scmp.eq.s32.totalorder %s29, 0
      %p145 = por %p143, %p144
      %s147 = sadd.s32 %s146, 1
      %p150 = scmp.eq.s32.totalorder %s23, 1
      %p151 = scmp.ne.s32.totalorder %s146, %s148
      %p152 = scmp.eq.s32.totalorder %s23, 0
      %p153 = por %p151, %p152
      %p154 = scmp.ne.s32.totalorder %s146, %s148
      %p155 = scmp.eq.s32.totalorder %s28, 1
      %p156 = por %p154, %p155
      %p157 = scmp.ne.s32.totalorder %s148, %s149
      %p158 = scmp.eq.s32.totalorder %s28, 0
      %p159 = por %p157, %p158
      %p160 = scmp.ne.s32.totalorder %s148, %s149
      %p161 = scmp.eq.s32.totalorder %s29, 1
      %p162 = por %p160, %p161
      %p164 = scmp.ne.s32.totalorder %s149, %s163
      %p165 = scmp.eq.s32.totalorder %s29, 0
      %p166 = por %p164, %p165
      %s168 = sadd.s32 %s167, 1
      %p171 = scmp.eq.s32.totalorder %s23, 1
      %p172 = scmp.ne.s32.totalorder %s167, %s169
      %p173 = scmp.eq.s32.totalorder %s23, 0
      %p174 = por %p172, %p173
      %p175 = scmp.ne.s32.totalorder %s167, %s169
      %p176 = scmp.eq.s32.totalorder %s28, 1
      %p177 = por %p175, %p176
      %p178 = scmp.ne.s32.totalorder %s169, %s170
      %p179 = scmp.eq.s32.totalorder %s28, 0
      %p180 = por %p178, %p179
      %p181 = scmp.ne.s32.totalorder %s169, %s170
      %p182 = scmp.eq.s32.totalorder %s29, 1
      %p183 = por %p181, %p182
      %p185 = scmp.ne.s32.totalorder %s170, %s184
      %p186 = scmp.eq.s32.totalorder %s29, 0
      %p187 = por %p185, %p186
      %s189 = sadd.s32 %s188, 1
      %p192 = scmp.eq.s32.totalorder %s23, 1
      %p193 = scmp.ne.s32.totalorder %s188, %s190
      %p194 = scmp.eq.s32.totalorder %s23, 0
      %p195 = por %p193, %p194
      %p196 = scmp.ne.s32.totalorder %s188, %s190
      %p197 = scmp.eq.s32.totalorder %s28, 1
      %p198 = por %p196, %p197
      %p199 = scmp.ne.s32.totalorder %s190, %s191
      %p200 = scmp.eq.s32.totalorder %s28, 0
      %p201 = por %p199, %p200
      %p202 = scmp.ne.s32.totalorder %s190, %s191
      %p203 = scmp.eq.s32.totalorder %s29, 1
      %p204 = por %p202, %p203
      %p206 = scmp.ne.s32.totalorder %s191, %s205
      %p207 = scmp.eq.s32.totalorder %s29, 0
      %p208 = por %p206, %p207
      %s210 = sadd.s32 %s209, 1
      %p213 = scmp.eq.s32.totalorder %s23, 1
      %p214 = scmp.ne.s32.totalorder %s209, %s211
      %p215 = scmp.eq.s32.totalorder %s23, 0
      %p216 = por %p214, %p215
      %p217 = scmp.ne.s32.totalorder %s209, %s211
      %p218 = scmp.eq.s32.totalorder %s28, 1
      %p219 = por %p217, %p218
      %p220 = scmp.ne.s32.totalorder %s211, %s212
      %p221 = scmp.eq.s32.totalorder %s28, 0
      %p222 = por %p220, %p221
      %p223 = scmp.ne.s32.totalorder %s211, %s212
      %p224 = scmp.eq.s32.totalorder %s29, 1
      %p225 = por %p223, %p224
      %p227 = scmp.ne.s32.totalorder %s212, %s226
      %p228 = scmp.eq.s32.totalorder %s29, 0
      %p229 = por %p227, %p228
      %s231 = sadd.s32 %s230, 1
      %p234 = scmp.eq.s32.totalorder %s23, 1
      %p235 = scmp.ne.s32.totalorder %s230, %s232
      %p236 = scmp.eq.s32.totalorder %s23, 0
      %p237 = por %p235, %p236
      %p238 = scmp.ne.s32.totalorder %s230, %s232
      %p239 = scmp.eq.s32.totalorder %s28, 1
      %p240 = por %p238, %p239
      %p241 = scmp.ne.s32.totalorder %s232, %s233
      %p242 = scmp.eq.s32.totalorder %s28, 0
      %p243 = por %p241, %p242
      %p244 = scmp.ne.s32.totalorder %s232, %s233
      %p245 = scmp.eq.s32.totalorder %s29, 1
      %p246 = por %p244, %p245
      %p248 = scmp.ne.s32.totalorder %s233, %s247
      %p249 = scmp.eq.s32.totalorder %s29, 0
      %p250 = por %p248, %p249
      %s251 = ssub.s32 %s23, %s30
      %p252 = scmp.eq.s32.totalorder %s251, 0
      %s254 = sadd.s32 %s253, 1
      %s255 = scalar_select %p252, %s253, %s254
      %p258 = pneg %p252
      %p259 = scmp.eq.s32.totalorder %s23, 1
      %p260 = por %p258, %p259
      %p261 = scmp.ne.s32.totalorder %s253, %s256
      %p262 = scmp.eq.s32.totalorder %s23, 0
      %p263 = por %p261, %p262
      %p264 = scmp.ne.s32.totalorder %s253, %s256
      %p265 = scmp.eq.s32.totalorder %s28, 1
      %p266 = por %p264, %p265
      %p267 = scmp.ne.s32.totalorder %s256, %s257
      %p268 = scmp.eq.s32.totalorder %s28, 0
      %p269 = por %p267, %p268
      %p270 = scmp.ne.s32.totalorder %s256, %s257
      %p271 = scmp.eq.s32.totalorder %s29, 1
      %p272 = por %p270, %p271
      %p274 = scmp.ne.s32.totalorder %s257, %s273
      %p275 = scmp.eq.s32.totalorder %s29, 0
      %p276 = por %p274, %p275
      %p277 = scmp.le.s32.totalorder 1, %s23
      %p278 = scmp.lt.s32.totalorder %s23, 3
      %p279 = pnand %p277, %p278
      %p280 = pneg %p279
      // Predicated region
      $region9: #{tpu_custom_call.1} parent=5 // pred_check
        _
      $region10: #{tpu_custom_call.1} parent=5 // pred_check_branch
        %282 = sbr.rel (%p279) target = $region12
      $region11: #{tpu_custom_call.1} parent=5 // pred_region
        %s283 = ssub.s32 %s23, 1
        // Predicated region
        $region13: #{tpu_custom_call.1} parent=11 // pred_check
          %p284 = pneg %p96
        $region14: #{tpu_custom_call.1} parent=11 // pred_check_branch
          %286 = sbr.rel (%p284) target = $region16
        $region15: #{tpu_custom_call.1} parent=11 // pred_region
          _
        $region16: #{tpu_custom_call.1} parent=11 // pred_fallthru
          _
        // Predicated region
        $region17: #{tpu_custom_call.1} parent=11 // pred_check
          %p287 = pneg %p117
        $region18: #{tpu_custom_call.1} parent=11 // pred_check_branch
          %289 = sbr.rel (%p287) target = $region20
        $region19: #{tpu_custom_call.1} parent=11 // pred_region
          _
        $region20: #{tpu_custom_call.1} parent=11 // pred_fallthru
          _
        // Predicated region
        $region21: #{tpu_custom_call.1} parent=11 // pred_check
          %p290 = pneg %p138
        $region22: #{tpu_custom_call.1} parent=11 // pred_check_branch
          %292 = sbr.rel (%p290) target = $region24
        $region23: #{tpu_custom_call.1} parent=11 // pred_region
          _
        $region24: #{tpu_custom_call.1} parent=11 // pred_fallthru
          _
        // Predicated region
        $region25: #{tpu_custom_call.1} parent=11 // pred_check
          %p293 = pneg %p159
        $region26: #{tpu_custom_call.1} parent=11 // pred_check_branch
          %295 = sbr.rel (%p293) target = $region28
        $region27: #{tpu_custom_call.1} parent=11 // pred_region
          _
        $region28: #{tpu_custom_call.1} parent=11 // pred_fallthru
          _
        // Predicated region
        $region29: #{tpu_custom_call.1} parent=11 // pred_check
          %p296 = pneg %p180
        $region30: #{tpu_custom_call.1} parent=11 // pred_check_branch
          %298 = sbr.rel (%p296) target = $region32
        $region31: #{tpu_custom_call.1} parent=11 // pred_region
          %300 = vsyncadd [#allocation8], 0
          %s301 = sshll.u32 %s6, 4
          %s302 = int_to_ptr.hbm [resolvable:$true] %s301
          %s303 = sshll.u32 [#allocation7], 4
          %s304 = int_to_ptr.vmem [resolvable:$true] %s303
          %309 = dma.hbm_to_vmem [thread:$0]  %s302, 192, %s304, [#allocation8], 64, 64, 4
        $region32: #{tpu_custom_call.1} parent=11 // pred_fallthru
          _
        // Predicated region
        $region33: #{tpu_custom_call.1} parent=11 // pred_check
          %p310 = pneg %p201
        $region34: #{tpu_custom_call.1} parent=11 // pred_check_branch
          %312 = sbr.rel (%p310) target = $region36
        $region35: #{tpu_custom_call.1} parent=11 // pred_region
          _
        $region36: #{tpu_custom_call.1} parent=11 // pred_fallthru
          _
        // Predicated region
        $region37: #{tpu_custom_call.1} parent=11 // pred_check
          %p313 = pneg %p222
        $region38: #{tpu_custom_call.1} parent=11 // pred_check_branch
          %315 = sbr.rel (%p313) target = $region40
        $region39: #{tpu_custom_call.1} parent=11 // pred_region
          _
        $region40: #{tpu_custom_call.1} parent=11 // pred_fallthru
          _
        // Predicated region
        $region41: #{tpu_custom_call.1} parent=11 // pred_check
          %p316 = pneg %p243
        $region42: #{tpu_custom_call.1} parent=11 // pred_check_branch
          %318 = sbr.rel (%p316) target = $region44
        $region43: #{tpu_custom_call.1} parent=11 // pred_region
          _
        $region44: #{tpu_custom_call.1} parent=11 // pred_fallthru
          _
      $region12: #{tpu_custom_call.1} parent=5 // pred_fallthru
        _
      %p319 = scmp.lt.s32.totalorder %s23, 2
      // Predicated region
      $region45: #{tpu_custom_call.1} parent=5 // pred_check
        %p320 = pneg %p319
      $region46: #{tpu_custom_call.1} parent=5 // pred_check_branch
        %322 = sbr.rel (%p320) target = $region48
      $region47: #{tpu_custom_call.1} parent=5 // pred_region
        // Predicated region
        $region49: #{tpu_custom_call.1} parent=47 // pred_check
          %p323 = pneg %p43
        $region50: #{tpu_custom_call.1} parent=47 // pred_check_branch
          %325 = sbr.rel (%p323) target = $region52
        $region51: #{tpu_custom_call.1} parent=47 // pred_region
          %s326 = sand.u32 %s33, 1
          %s327 = scalar_lea.sflag [#allocation5], %s326
          %s328 = sand.u32 %s33, 1
          %s329 = smul.addr %s328, 4
          %s330 = scalar_lea.vmem [#allocation4], %s329
          %332 = vsyncadd %s327, 0
          %s333 = smul.addr %s23, 4
          %s334 = scalar_lea.hbm %s0, %s333
          %s336 = sshll.u32 %s334, 4
          %s337 = int_to_ptr.hbm [resolvable:$true] %s336
          %s338 = sshll.u32 %s330, 4
          %s339 = int_to_ptr.vmem [resolvable:$true] %s338
          %341 = dma.hbm_to_vmem [thread:$0]  %s337, 64, %s339, %s327
        $region52: #{tpu_custom_call.1} parent=47 // pred_fallthru
          _
        // Predicated region
        $region53: #{tpu_custom_call.1} parent=47 // pred_check
          %p342 = pneg %p69
        $region54: #{tpu_custom_call.1} parent=47 // pred_check_branch
          %344 = sbr.rel (%p342) target = $region56
        $region55: #{tpu_custom_call.1} parent=47 // pred_region
          %p345 = scmp.lt.s32.totalorder %s23, 1
          %s346 = scalar_select %p345, %s23, 1
          %s347 = smul.addr %s346, 2
          %s348 = scalar_lea.vmem %s1, %s347
        $region56: #{tpu_custom_call.1} parent=47 // pred_fallthru
          _
      $region48: #{tpu_custom_call.1} parent=5 // pred_fallthru
        _
      %p349 = scmp.le.s32.totalorder 1, %s23
      %p350 = scmp.lt.s32.totalorder %s23, 3
      %p351 = pnand %p349, %p350
      %p352 = pneg %p351
      // Predicated region
      $region57: #{tpu_custom_call.1} parent=5 // pred_check
        _
      $region58: #{tpu_custom_call.1} parent=5 // pred_check_branch
        %354 = sbr.rel (%p351) target = $region60
      $region59: #{tpu_custom_call.1} parent=5 // pred_region
        %s355 = ssub.s32 %s23, 1
        %s356 = sand.u32 %s36, 1
        %s357 = scalar_lea.sflag [#allocation5], %s356
        %s358 = sand.u32 %s36, 1
        %s359 = smul.addr %s358, 4
        %s360 = scalar_lea.vmem [#allocation4], %s359
        // Predicated region
        $region61: #{tpu_custom_call.1} parent=59 // pred_check
          %p361 = pneg %p49
        $region62: #{tpu_custom_call.1} parent=59 // pred_check_branch
          %363 = sbr.rel (%p361) target = $region64
        $region63: #{tpu_custom_call.1} parent=59 // pred_region
          %365 = dma.done %s357, 64
        $region64: #{tpu_custom_call.1} parent=59 // pred_fallthru
          _
        // Predicated region
        $region65: #{tpu_custom_call.1} parent=59 // pred_check
          %p366 = pneg %p180
        $region66: #{tpu_custom_call.1} parent=59 // pred_check_branch
          %368 = sbr.rel (%p366) target = $region68
        $region67: #{tpu_custom_call.1} parent=59 // pred_region
          %370 = dma.done [#allocation8], 192
        $region68: #{tpu_custom_call.1} parent=59 // pred_fallthru
          _
        %s371 = sand.u32 %s36, 1
        %s372 = scalar_lea.sflag [#allocation5], %s371
        %s373 = sand.u32 %s36, 1
        %s374 = smul.addr %s373, 4
        %s375 = scalar_lea.vmem [#allocation4], %s374
        %p376 = pneg %p49
        %p377 = pneg %p46
        %p378 = scmp.lt.s32.totalorder %s28, 1
        %s379 = scalar_select %p378, %s28, 1
        %s380 = smul.addr %s379, 2
        %s381 = scalar_lea.vmem %s1, %s380
        %p382 = pneg %p75
        %p383 = pneg %p72
        %p384 = pneg %p96
        %p385 = pneg %p93
        %p386 = pneg %p117
        %p387 = pneg %p114
        %p388 = pneg %p138
        %p389 = pneg %p135
        %p390 = pneg %p159
        %p391 = pneg %p156
        %p392 = pneg %p180
        %p393 = pneg %p177
        %p394 = pneg %p201
        %p395 = pneg %p198
        %p396 = pneg %p222
        %p397 = pneg %p219
        %p398 = pneg %p243
        %p399 = pneg %p240
        %p400 = pneg %p269
        %p401 = pneg %p266
        %s402 = sand.u32 %s256, 1
        %s403 = scalar_lea.sflag [#allocation6], %s402
        %s404 = sand.u32 %s256, 1
        %s405 = smul.addr %s404, 4
        %s406 = scalar_lea.vmem [#allocation9], %s405
        %p407 = scmp.lt.s32.totalorder %s28, 1
        %s408 = scalar_select %p407, %s28, 1
        %s409 = smul.addr %s408, 2
        %s410 = scalar_lea.vmem %s1, %s409
        %v412 = vld [vmem:[%s360] sm:$0xf]
        %v413 = vld [vmem:[%s410] sm:$0x3]
        %v414 = vld [vmem:[%s2] sm:$0xf]
        %v415 = vld [vmem:[%s2 + $0x4] sm:$0xf]
        %v418 = vunpack.c.l.b16 %v414
        %v419 = vunpack.c.l.b16 %v415
        %v420 = vpack.c.b16 %v419, %v418
        %vm422 = vcmask 130048
        %v424 = vsel %vm422, %v412, 0
        %426 = vmatpush.bf16.msra.mxu0 0
        %427 = vmatpush.bf16.msra.mxu0 0
        %428 = vmatpush.bf16.msra.mxu0 0
        %429 = vmatpush.bf16.msra.mxu0 0
        %430 = vmatpush.bf16.msra.mxu0 0
        %431 = vmatpush.bf16.msra.mxu0 0
        %432 = vmatpush.bf16.msra.mxu0 0
        %433 = vmatpush.bf16.msra.mxu0 %v420
        %434 = vmatmul.bf16.gmra.mxu0 %v424
        %v435 = vpop.f32.mrf.mxu0
        %v436 = vadd.f32 0.0, %v435
        %v437 = vpop.f32.mrf.mxu0
        %438 = vdwg.mxu0
        %s439 = scalar_lea.vmem %s2, 8
        %v440 = vld [vmem:[%s439] sm:$0xf]
        %v441 = vld [vmem:[%s439 + $0x4] sm:$0xf]
        %v444 = vunpack.c.l.b16 %v440
        %v445 = vunpack.c.l.b16 %v441
        %v446 = vpack.c.b16 %v445, %v444
        %448 = vmatpush.bf16.msra.mxu0 0
        %449 = vmatpush.bf16.msra.mxu0 0
        %450 = vmatpush.bf16.msra.mxu0 0
        %451 = vmatpush.bf16.msra.mxu0 0
        %452 = vmatpush.bf16.msra.mxu0 0
        %453 = vmatpush.bf16.msra.mxu0 0
        %454 = vmatpush.bf16.msra.mxu0 0
        %455 = vmatpush.bf16.msra.mxu0 %v446
        %456 = vmatmul.bf16.gmra.mxu0 %v424
        %v457 = vpop.f32.mrf.mxu0
        %v458 = vadd.f32 0.0, %v457
        %v459 = vpop.f32.mrf.mxu0
        %460 = vdwg.mxu0
        %s461 = scalar_lea.vmem %s2, 16
        %v462 = vld [vmem:[%s461] sm:$0xf]
        %v463 = vld [vmem:[%s461 + $0x4] sm:$0xf]
        %v466 = vunpack.c.l.b16 %v462
        %v467 = vunpack.c.l.b16 %v463
        %v468 = vpack.c.b16 %v467, %v466
        %470 = vmatpush.bf16.msra.mxu0 0
        %471 = vmatpush.bf16.msra.mxu0 0
        %472 = vmatpush.bf16.msra.mxu0 0
        %473 = vmatpush.bf16.msra.mxu0 0
        %474 = vmatpush.bf16.msra.mxu0 0
        %475 = vmatpush.bf16.msra.mxu0 0
        %476 = vmatpush.bf16.msra.mxu0 0
        %477 = vmatpush.bf16.msra.mxu0 %v468
        %478 = vmatmul.bf16.gmra.mxu0 %v424
        %v479 = vpop.f32.mrf.mxu0
        %v480 = vadd.f32 0.0, %v479
        %v481 = vpop.f32.mrf.mxu0
        %482 = vdwg.mxu0
        %v483 = vld [vmem:[%s3] sm:$0x3]
        %v484 = vpack.c.bf16 %v458, %v436
        %v485 = vpack.c.bf16 %v480, %v480
        %v486 = vld [vmem:[%s4] sm:$0xf]
        %488 = vset.pattern.permute.xlu0 0
        %489 = vperm.xlu0 %488, %v486
        %v490 = vpop.permute.xlu0 %489
        %vm492 = vcmask 195584
        %v494 = vsel %vm492, %v483, 0
        %vm496 = vcmask 1043456
        %v498 = vsel %vm496, %v485, 0
        %500 = vmatpush.bf16.msra.mxu0 0
        %501 = vmatpush.bf16.msra.mxu0 0
        %502 = vmatpush.bf16.msra.mxu0 0
        %503 = vmatpush.bf16.msra.mxu0 0
        %504 = vmatpush.bf16.msra.mxu0 0
        %505 = vmatpush.bf16.msra.mxu0 0
        %506 = vmatpush.bf16.msra.mxu0 %v498
        %507 = vmatpush.bf16.msra.mxu0 %v484
        %508 = vmatmul.bf16.gmra.mxu0 %v494
        %v509 = vpop.f32.mrf.mxu0
        %v510 = vadd.f32 %v490, %v509
        %v511 = vpop.f32.mrf.mxu0
        %512 = vdwg.mxu0
        %v513 = vld [vmem:[%s5] sm:$0x3]
        %vm514 = vcmask 31744
        %v516 = vsel %vm514, %v513, 0
        %vm518 = vcmask 1041408
        %v520 = vsel %vm518, %v413, 0
        %522 = vmatpush.bf16.msra.mxu0 0
        %523 = vmatpush.bf16.msra.mxu0 0
        %524 = vmatpush.bf16.msra.mxu0 0
        %525 = vmatpush.bf16.msra.mxu0 0
        %526 = vmatpush.bf16.msra.mxu0 0
        %527 = vmatpush.bf16.msra.mxu0 0
        %528 = vmatpush.bf16.msra.mxu0 0
        %529 = vmatpush.bf16.msra.mxu0 %v520
        %530 = vmatmul.bf16.gmra.mxu0 %v516
        %v531 = vpop.f32.mrf.mxu0
        %v532 = vadd.f32 0.0, %v531
        %v533 = vpop.f32.mrf.mxu0
        %534 = vdwg.mxu0
        %vm535 = vcmask 146432
        %536 = vst.msk [vmem:[#allocation2] sm:$0xff] %vm535, 0.0
        %538 = vrot.lane.b32.xlu0 %v532, 1
        %v539 = vpop.permute.xlu0 %538
        %vm541 = vcmask 134152
        %542 = vst.msk [vmem:[#allocation2] sm:$0xf] %vm541, %v539
        %544 = vrot.lane.b32.xlu0 %v510, 1
        %v545 = vpop.permute.xlu0 %544
        %vm547 = vcmask 125960
        %548 = vst.msk [vmem:[#allocation2 + $0x4] sm:$0xf] %vm547, %v545
        %v549 = vld [vmem:[#allocation2] sm:$0xff]
        %551 = vrot.lane.b32.xlu0 %v549, 127
        %v552 = vpop.permute.xlu0 %551
        %554 = vrot.lane.b32.xlu0 %v549, 126
        %v555 = vpop.permute.xlu0 %554
        %v557 = vld [vmem:[#allocation7] sm:$0xf]
        %v558 = vld [vmem:[#allocation7 + $0x4] sm:$0xf]
        %v559 = vld [vmem:[#allocation7 + $0x8] sm:$0xf]
        %v560 = vpack.c.bf16 %v552, %v549
        %v561 = vpack.c.bf16 %v555, %v555
        %v562 = vld [vmem:[%s7] sm:$0xff]
        %v563 = vld [vmem:[%s7 + $0x8] sm:$0xff]
        %v564 = vld [vmem:[%s7 + $0x10] sm:$0xff]
        %566 = vset.pattern.permute.xlu0 0
        %567 = vperm.xlu0 %566, %v562
        %v568 = vpop.permute.xlu0 %567
        %571 = vset.pattern.permute.xlu0 0
        %572 = vperm.xlu0 %571, %v563
        %v573 = vpop.permute.xlu0 %572
        %576 = vset.pattern.permute.xlu0 0
        %577 = vperm.xlu0 %576, %v564
        %v578 = vpop.permute.xlu0 %577
        %v583 = vunpack.c.l.b16 %v557
        %v584 = vunpack.c.l.b16 %v558
        %v585 = vunpack.c.l.b16 %v559
        %v586 = vpack.c.b16 %v584, %v583
        %v587 = vpack.c.b16 %v585, %v585
        %v589 = vsel %vm492, %v586, 0
        %v592 = vsel %vm492, %v587, 0
        %v595 = vsel %vm496, %v561, 0
        %597 = vmatpush.bf16.msra.mxu0 0
        %598 = vmatpush.bf16.msra.mxu0 0
        %599 = vmatpush.bf16.msra.mxu0 0
        %600 = vmatpush.bf16.msra.mxu0 0
        %601 = vmatpush.bf16.msra.mxu0 0
        %602 = vmatpush.bf16.msra.mxu0 0
        %603 = vmatpush.bf16.msra.mxu0 %v595
        %604 = vmatpush.bf16.msra.mxu0 %v560
        %605 = vmatmul.bf16.gmra.mxu0 %v589
        %v606 = vpop.f32.mrf.mxu0
        %v607 = vadd.f32 %v568, %v606
        %v608 = vpop.f32.mrf.mxu0
        %v609 = vadd.f32 %v573, %v608
        %610 = vmatmul.bf16.gmra.mxu0 %v592
        %v611 = vpop.f32.mrf.mxu0
        %v612 = vadd.f32 %v578, %v611
        %v613 = vpop.f32.mrf.mxu0
        %614 = vdwg.mxu0
        %vm615 = vcmp.gt.f32.partialorder %v607, 0.0
        %vm616 = vcmp.gt.f32.partialorder %v609, 0.0
        %vm617 = vcmp.gt.f32.partialorder %v612, 0.0
        %v618 = vmul.f32 %v607, 0.01
        %v619 = vmul.f32 %v609, 0.01
        %v620 = vmul.f32 %v612, 0.01
        %v621 = vsel %vm615, %v607, %v618
        %v622 = vsel %vm616, %v609, %v619
        %v623 = vsel %vm617, %v612, %v620
        %vm624 = vcmask 162816
        %625 = vst.msk [vmem:[#allocation3] sm:$0xff] %vm624, 0.0
        %626 = vst.msk [vmem:[#allocation3 + $0x8] sm:$0xff] %vm624, 0.0
        %627 = vst.msk [vmem:[#allocation3 + $0x10] sm:$0xff] %vm624, 0.0
        %631 = vrot.lane.b32.xlu0 %v621, 2
        %v632 = vpop.permute.xlu0 %631
        %633 = vrot.lane.b32.xlu0 %v622, 2
        %v634 = vpop.permute.xlu0 %633
        %635 = vrot.lane.b32.xlu0 %v623, 2
        %v636 = vpop.permute.xlu0 %635
        %vm640 = vcmask 146448
        %641 = vst.msk [vmem:[#allocation3] sm:$0xff] %vm640, %v632
        %642 = vst.msk [vmem:[#allocation3 + $0x8] sm:$0xff] %vm640, %v634
        %643 = vst.msk [vmem:[#allocation3 + $0x10] sm:$0xff] %vm640, %v636
        %v644 = vld [vmem:[#allocation3] sm:$0xff]
        %v645 = vld [vmem:[#allocation3 + $0x8] sm:$0xff]
        %v646 = vld [vmem:[#allocation3 + $0x10] sm:$0xff]
        %650 = vrot.lane.b32.xlu0 %v644, 126
        %v651 = vpop.permute.xlu0 %650
        %652 = vrot.lane.b32.xlu0 %v645, 126
        %v653 = vpop.permute.xlu0 %652
        %654 = vrot.lane.b32.xlu0 %v646, 126
        %v655 = vpop.permute.xlu0 %654
        %659 = vrot.lane.b32.xlu0 %v644, 124
        %v660 = vpop.permute.xlu0 %659
        %661 = vrot.lane.b32.xlu0 %v645, 124
        %v662 = vpop.permute.xlu0 %661
        %663 = vrot.lane.b32.xlu0 %v646, 124
        %v664 = vpop.permute.xlu0 %663
        %v668 = vld [vmem:[%s8] sm:$0x3]
        %v669 = vpack.c.bf16 %v645, %v644
        %v670 = vpack.c.bf16 %v651, %v646
        %v671 = vpack.c.bf16 %v655, %v653
        %v672 = vpack.c.bf16 %v662, %v660
        %v673 = vpack.c.bf16 %v664, %v664
        %v674 = vld [vmem:[%s9] sm:$0xf]
        %676 = vset.pattern.permute.xlu0 0
        %677 = vperm.xlu0 %676, %v674
        %v678 = vpop.permute.xlu0 %677
        %vm680 = vcmask 588800
        %v682 = vsel %vm680, %v668, 0
        %v685 = vsel %vm496, %v673, 0
        %687 = vmatpush.bf16.msra.mxu0 0
        %688 = vmatpush.bf16.msra.mxu0 0
        %689 = vmatpush.bf16.msra.mxu0 0
        %690 = vmatpush.bf16.msra.mxu0 %v685
        %691 = vmatpush.bf16.msra.mxu0 %v672
        %692 = vmatpush.bf16.msra.mxu0 %v671
        %693 = vmatpush.bf16.msra.mxu0 %v670
        %694 = vmatpush.bf16.msra.mxu0 %v669
        %695 = vmatmul.bf16.gmra.mxu0 %v682
        %v696 = vpop.f32.mrf.mxu0
        %v697 = vadd.f32 %v678, %v696
        %v698 = vpop.f32.mrf.mxu0
        %699 = vdwg.mxu0
        %vm700 = vcmp.gt.f32.partialorder %v697, 0.0
        %v701 = vmul.f32 %v697, 0.01
        %v702 = vsel %vm700, %v697, %v701
        %vm703 = vcmask 125952
        %704 = vst.msk [vmem:[%s406] sm:$0xf] %vm703, %v702
        %s705 = sand.u32 %s256, 1
        %s706 = scalar_lea.sflag [#allocation6], %s705
        %s707 = sand.u32 %s256, 1
        %s708 = smul.addr %s707, 4
        %s709 = scalar_lea.vmem [#allocation9], %s708
        // Predicated region
        $region69: #{tpu_custom_call.1} parent=59 // pred_check
          %p710 = pneg %p266
        $region70: #{tpu_custom_call.1} parent=59 // pred_check_branch
          %712 = sbr.rel (%p710) target = $region72
        $region71: #{tpu_custom_call.1} parent=59 // pred_region
          %714 = vsyncadd %s706, 0
          %s715 = smul.addr %s28, 4
          %s716 = scalar_lea.hbm %s10, %s715
          %s718 = sshll.u32 %s709, 4
          %s719 = int_to_ptr.vmem [resolvable:$true] %s718
          %s720 = sshll.u32 %s716, 4
          %s721 = int_to_ptr.hbm [resolvable:$true] %s720
          %723 = dma.vmem_to_hbm [thread:$0]  %s719, 64, %s721, %s706
        $region72: #{tpu_custom_call.1} parent=59 // pred_fallthru
          _
      $region60: #{tpu_custom_call.1} parent=5 // pred_fallthru
        _
      %p724 = scmp.le.s32.totalorder 2, %s23
      // Predicated region
      $region73: #{tpu_custom_call.1} parent=5 // pred_check
        %p725 = pneg %p724
      $region74: #{tpu_custom_call.1} parent=5 // pred_check_branch
        %727 = sbr.rel (%p725) target = $region76
      $region75: #{tpu_custom_call.1} parent=5 // pred_region
        %s728 = ssub.s32 %s23, 2
        // Predicated region
        $region77: #{tpu_custom_call.1} parent=75 // pred_check
          %p729 = pneg %p272
        $region78: #{tpu_custom_call.1} parent=75 // pred_check_branch
          %731 = sbr.rel (%p729) target = $region80
        $region79: #{tpu_custom_call.1} parent=75 // pred_region
          %s732 = sand.u32 %s257, 1
          %s733 = scalar_lea.sflag [#allocation6], %s732
          %s734 = sand.u32 %s257, 1
          %s735 = smul.addr %s734, 4
          %s736 = scalar_lea.vmem [#allocation9], %s735
          %738 = dma.done %s733, 64
        $region80: #{tpu_custom_call.1} parent=75 // pred_fallthru
          _
      $region76: #{tpu_custom_call.1} parent=5 // pred_fallthru
        _
    $region6: #{tpu_custom_call.1} parent=1 // loop_footer
      %s27 = sadd.s32 1, %s23
    $region7: #{tpu_custom_call.1} parent=1 // loop_footer_branch
      %22 = sbr.rel target = $region3
    $region8: #{tpu_custom_call.1} parent=1 // loop_exit
      _
    %739 = vsyncpa [#allocation5], 1
    %s740 = scalar_lea.sflag [#allocation5], 1
    %741 = vsyncpa %s740, 1
    %742 = vsyncpa [#allocation8], 1
    %743 = vsyncpa [#allocation6], 1
    %s744 = scalar_lea.sflag [#allocation6], 1
    %745 = vsyncpa %s744, 1

</llo_original>
